<compile_context>
chip_gen: v5e
topology: v5e:2x2
jax: 0.10.0
libtpu: 0.0.40
codegen_flags: <defaults>
</compile_context>

<pallas_src>
import jax
import jax.numpy as jnp
from jax.experimental import pallas as pl
from jax.experimental.pallas import tpu as pltpu

LANE = 128
SUBLANE = 8


def _round_up(x, m):
    return ((x + m - 1) // m) * m


def make_ae_kernel(out_p, col_off, compute_dtype):
    """Build the fused forward kernel with static padded widths / column offsets."""

    def ae_kernel(x_ref, b_ref,
                  w1, w2, w3, wz, w4, w5, w6, wx,
                  out_ref):
        def linear(a, w_ref, layer):
            # MXU matmul in compute_dtype, f32 accumulation; bias add in f32.
            y = jnp.dot(a, w_ref[...], preferred_element_type=jnp.float32)
            return y + b_ref[layer:layer + 1, :out_p[layer]]

        def store(name, val_f32):
            off = col_off[name]
            out_ref[:, off:off + val_f32.shape[1]] = val_f32.astype(out_ref.dtype)

        a = x_ref[...]                                   # already compute_dtype
        # Encoder — each requested activation is written into its static
        # column range of the fused output slab as soon as it is produced.
        h1 = jnp.maximum(linear(a, w1, 0), 0.0)
        store("h1", h1)
        h2 = jnp.maximum(linear(h1.astype(compute_dtype), w2, 1), 0.0)
        store("h2", h2)
        h3 = jnp.maximum(linear(h2.astype(compute_dtype), w3, 2), 0.0)
        store("h3", h3)
        z = linear(h3.astype(compute_dtype), wz, 3)
        store("z", z)
        # Decoder
        d1 = jnp.maximum(linear(z.astype(compute_dtype), w4, 4), 0.0)
        d2 = jnp.maximum(linear(d1.astype(compute_dtype), w5, 5), 0.0)
        d3 = jnp.maximum(linear(d2.astype(compute_dtype), w6, 6), 0.0)
        x_bar = linear(d3.astype(compute_dtype), wx, 7)
        store("x_bar", x_bar)

    return ae_kernel


def ae_train_forward(x, params, *, max_tb=1024, compute_dtype=jnp.bfloat16):
    """params: list of 8 (W, b); W shape (fan_in, fan_out), b shape (fan_out,).

    Returns (x_bar, enc_h1, enc_h2, enc_h3, z), matching AE_train.forward.
    Outputs are produced in x.dtype; matmuls run in `compute_dtype` on the MXU
    with f32 accumulation."""
    B, n_input = x.shape
    assert len(params) == 8
    out_dtype = x.dtype
    out_itemsize = jnp.dtype(out_dtype).itemsize
    cd_size = jnp.dtype(compute_dtype).itemsize

    in_dims = [w.shape[0] for (w, _) in params]
    out_dims = [w.shape[1] for (w, _) in params]
    assert in_dims[0] == n_input and out_dims[-1] == n_input

    # ---- lane-dense padding: every feature dim -> multiple of 128 ------------
    in_p = [_round_up(d, LANE) for d in in_dims]
    out_p = [_round_up(d, LANE) for d in out_dims]
    n_input_p = in_p[0]

    w_pad = [
        jnp.pad(w.astype(compute_dtype),
                ((0, ip - w.shape[0]), (0, op - w.shape[1])))
        for (w, _), ip, op in zip(params, in_p, out_p)
    ]
    bmax = max(out_p)
    b_stack = jnp.zeros((8, bmax), jnp.float32)          # f32 bias rows (exact add)
    for i, (_, b) in enumerate(params):
        b_stack = b_stack.at[i, : b.shape[0]].set(b.astype(jnp.float32))

    # ---- batch tiling ---------------------------------------------------------
    # Large tiles (up to max_tb) to amortize per-step overhead, multiple of 8
    # sublanes; force >= 2 grid steps when possible so v7x's 2 TCs both work.
    tb = min(max_tb, _round_up(B, SUBLANE))
    if _round_up(B, tb) // tb < 2 and tb > SUBLANE:
        tb = _round_up(-(-B // 2), SUBLANE)
    Bp = _round_up(B, tb)
    grid = (Bp // tb,)

    x_p = jnp.pad(x, ((0, Bp - B), (0, n_input_p - n_input))).astype(compute_dtype)

    # ---- fused lane-dense output slab: [x_bar | h1 | h2 | h3 | z] -------------
    out_order = [("x_bar", out_p[7]), ("h1", out_p[0]), ("h2", out_p[1]),
                 ("h3", out_p[2]), ("z", out_p[3])]
    col_off, cursor = {}, 0
    for name, width in out_order:
        col_off[name] = cursor
        cursor += width
    total_out_p = cursor

    out_shape = jax.ShapeDtypeStruct((Bp, total_out_p), out_dtype)
    out_spec = pl.BlockSpec((tb, total_out_p), lambda i: (i, 0))

    # Grid-invariant operands: fully VMEM-resident, single-buffered.
    resident_spec = pl.BlockSpec(memory_space=pltpu.MemorySpace.VMEM)
    in_specs = [pl.BlockSpec((tb, n_input_p), lambda i: (i, 0)),  # x: streamed
                resident_spec]                                    # stacked biases
    in_specs += [resident_spec] * 8                               # 8 weight matrices

    # ---- VMEM budget (generation-aware cap) -----------------------------------
    resident_bytes = sum(w.size for w in w_pad) * cd_size + b_stack.size * 4
    stream_bytes = 2 * tb * n_input_p * cd_size + 2 * tb * total_out_p * out_itemsize
    # Worst-case live set: current layer input (compute dtype) + f32 dot output
    # + the compute-dtype copy fed to the next layer.
    act_bytes = tb * max(ip * cd_size + op * (4 + cd_size)
                         for ip, op in zip(in_p, out_p))
    need = resident_bytes + stream_bytes + act_bytes
    try:
        cap = int(getattr(pltpu.get_tpu_info(), "vmem_capacity_bytes", 64 * 2 ** 20))
    except Exception:
        cap = 64 * 2 ** 20                                # conservative (v7x per-TC)
    vmem_limit = int(min(max(int(need * 1.25) + (4 << 20), 16 << 20),
                         int(0.85 * cap)))

    flops = 2 * Bp * sum(ip * op for ip, op in zip(in_p, out_p))
    bytes_accessed = int(x_p.size * cd_size
                         + sum(w.size for w in w_pad) * cd_size
                         + b_stack.size * 4
                         + Bp * total_out_p * out_itemsize)

    fn = pl.pallas_call(
        make_ae_kernel(out_p, col_off, compute_dtype),
        out_shape=out_shape,
        grid_spec=pltpu.PrefetchScalarGridSpec(
            num_scalar_prefetch=0,
            grid=grid,
            in_specs=in_specs,
            out_specs=out_spec,
        ),
        compiler_params=pltpu.CompilerParams(
            dimension_semantics=("parallel",),
            vmem_limit_bytes=vmem_limit,
        ),
        cost_estimate=pl.CostEstimate(
            flops=flops, transcendentals=0, bytes_accessed=bytes_accessed),
    )
    out_slab = fn(x_p, b_stack, *w_pad)

    # Strip padding / split the slab back to the module's logical shapes.
    def take(name, logical_width):
        off = col_off[name]
        return out_slab[:B, off:off + logical_width]

    x_bar = take("x_bar", out_dims[7])
    enc_h1 = take("h1", out_dims[0])
    enc_h2 = take("h2", out_dims[1])
    enc_h3 = take("h3", out_dims[2])
    z = take("z", out_dims[3])
    return x_bar, enc_h1, enc_h2, enc_h3, z


def init_linear(key, fan_in, fan_out, dtype=jnp.float32):
    # Deterministic PyTorch-style init: U(-1/sqrt(fan_in), 1/sqrt(fan_in)).
    kw, kb = jax.random.split(key)
    bound = 1.0 / (fan_in ** 0.5)
    w = jax.random.uniform(kw, (fan_in, fan_out), dtype, -bound, bound)
    b = jax.random.uniform(kb, (fan_out,), dtype, -bound, bound)
    return w, b


def reference_forward(x, params):
    def lin(a, p):
        return a @ p[0] + p[1]
    h1 = jax.nn.relu(lin(x, params[0]))
    h2 = jax.nn.relu(lin(h1, params[1]))
    h3 = jax.nn.relu(lin(h2, params[2]))
    z = lin(h3, params[3])
    d1 = jax.nn.relu(lin(z, params[4]))
    d2 = jax.nn.relu(lin(d1, params[5]))
    d3 = jax.nn.relu(lin(d2, params[6]))
    x_bar = lin(d3, params[7])
    return x_bar, h1, h2, h3, z


if __name__ == "__main__":
    # Small, forward-consistent sizes.
    n_input = 32
    n_enc_1, n_enc_2, n_enc_3 = 64, 32, 128
    n_z = 16
    n_dec_1, n_dec_2, n_dec_3 = 128, 32, 64
    batch = 16

    layer_dims = [
        (n_input, n_enc_1), (n_enc_1, n_enc_2), (n_enc_2, n_enc_3), (n_enc_3, n_z),
        (n_z, n_dec_1), (n_dec_1, n_dec_2), (n_dec_2, n_dec_3), (n_dec_3, n_input),
    ]

    root = jax.random.PRNGKey(0)
    keys = jax.random.split(root, len(layer_dims) + 1)
    params = [init_linear(keys[i], fi, fo) for i, (fi, fo) in enumerate(layer_dims)]
    x = jax.random.normal(keys[-1], (batch, n_input), jnp.float32)

    refs = reference_forward(x, params)
    names = ["x_bar", "enc_h1", "enc_h2", "enc_h3", "z"]

    # 1) f32 debug path: bit-accurate vs the f32 reference.
    outs_f32 = jax.block_until_ready(
        ae_train_forward(x, params, compute_dtype=jnp.float32))
    for name, o, r in zip(names, outs_f32, refs):
        assert o.shape == r.shape and o.dtype == r.dtype, name
        assert jnp.allclose(o, r, atol=1e-4, rtol=1e-4), f"f32 mismatch: {name}"

    # 2) bf16 fast path (default): same semantics, loosened tolerance.
    outs_bf16 = jax.block_until_ready(ae_train_forward(x, params))
    for name, o, r in zip(names, outs_bf16, refs):
        assert o.shape == r.shape and o.dtype == r.dtype, name
        assert jnp.allclose(o, r, atol=5e-2, rtol=5e-2), f"bf16 mismatch: {name}"

    print("KERNEL_OK")
</pallas_src>

<mosaic_0001>
module attributes {stable_mosaic.version = 11 : i64} {
  func.func @ae_kernel(%arg0: i32, %arg1: memref<8x128xf32, #tpu.memory_space<vmem>>, %arg2: memref<8x128xf32, #tpu.memory_space<vmem>>, %arg3: memref<128x128xf32, #tpu.memory_space<vmem>>, %arg4: memref<128x128xf32, #tpu.memory_space<vmem>>, %arg5: memref<128x128xf32, #tpu.memory_space<vmem>>, %arg6: memref<128x128xf32, #tpu.memory_space<vmem>>, %arg7: memref<128x128xf32, #tpu.memory_space<vmem>>, %arg8: memref<128x128xf32, #tpu.memory_space<vmem>>, %arg9: memref<128x128xf32, #tpu.memory_space<vmem>>, %arg10: memref<128x128xf32, #tpu.memory_space<vmem>>, %arg11: memref<8x640xf32, #tpu.memory_space<vmem>>) attributes {dimension_semantics = [#tpu.dimension_semantics<parallel>], iteration_bounds = array<i64: 2>, scalar_prefetch = 0 : i64, scratch_operands = 0 : i64, tpu.core_type = #tpu.core_type<tc>, window_params = [{transform_indices = @transform_0, window_bounds = array<i64: 8, 128>}, {pipeline_mode = #tpu.pipeline_mode<synchronous>, transform_indices = @transform_1, window_bounds = array<i64: 8, 128>}, {pipeline_mode = #tpu.pipeline_mode<synchronous>, transform_indices = @transform_2, window_bounds = array<i64: 128, 128>}, {pipeline_mode = #tpu.pipeline_mode<synchronous>, transform_indices = @transform_3, window_bounds = array<i64: 128, 128>}, {pipeline_mode = #tpu.pipeline_mode<synchronous>, transform_indices = @transform_4, window_bounds = array<i64: 128, 128>}, {pipeline_mode = #tpu.pipeline_mode<synchronous>, transform_indices = @transform_5, window_bounds = array<i64: 128, 128>}, {pipeline_mode = #tpu.pipeline_mode<synchronous>, transform_indices = @transform_6, window_bounds = array<i64: 128, 128>}, {pipeline_mode = #tpu.pipeline_mode<synchronous>, transform_indices = @transform_7, window_bounds = array<i64: 128, 128>}, {pipeline_mode = #tpu.pipeline_mode<synchronous>, transform_indices = @transform_8, window_bounds = array<i64: 128, 128>}, {pipeline_mode = #tpu.pipeline_mode<synchronous>, transform_indices = @transform_9, window_bounds = array<i64: 128, 128>}, {transform_indices = @transform_10, window_bounds = array<i64: 8, 640>}]} {
    %c0 = arith.constant 0 : index
    %c0_0 = arith.constant 0 : index
    %0 = vector.load %arg1[%c0, %c0_0] : memref<8x128xf32, #tpu.memory_space<vmem>>, vector<8x128xf32>
    %c0_1 = arith.constant 0 : index
    %c0_2 = arith.constant 0 : index
    %1 = vector.load %arg3[%c0_1, %c0_2] : memref<128x128xf32, #tpu.memory_space<vmem>>, vector<128x128xf32>
    %cst = arith.constant dense<0.000000e+00> : vector<8x128xf32>
    %2 = tpu.matmul %0, %1, %cst {dimension_numbers = #tpu.dot_dimension_numbers<[1], [0], [0], [1], [0, 0, 1, 1], [], []>} : vector<8x128xf32>, vector<128x128xf32>, vector<8x128xf32> -> vector<8x128xf32>
    %c0_3 = arith.constant 0 : index
    %c0_4 = arith.constant 0 : index
    %3 = vector.load %arg2[%c0_3, %c0_4] : memref<8x128xf32, #tpu.memory_space<vmem>>, vector<1x128xf32>
    %4 = vector.broadcast %3 : vector<1x128xf32> to vector<8x128xf32>
    %5 = arith.addf %2, %4 : vector<8x128xf32>
    %cst_5 = arith.constant 0.000000e+00 : f32
    %6 = vector.broadcast %cst_5 : f32 to vector<8x128xf32>
    %7 = arith.maximumf %5, %6 : vector<8x128xf32>
    %c0_6 = arith.constant 0 : index
    %c128 = arith.constant 128 : index
    %8 = vector.load %arg11[%c0_6, %c128] : memref<8x640xf32, #tpu.memory_space<vmem>>, vector<8x128xf32>
    tpu.vector_store %arg11[%c0_6, %c128], %7 {strides = array<i32>} : memref<8x640xf32, #tpu.memory_space<vmem>>, vector<8x128xf32>,
    %c0_7 = arith.constant 0 : index
    %c0_8 = arith.constant 0 : index
    %9 = vector.load %arg4[%c0_7, %c0_8] : memref<128x128xf32, #tpu.memory_space<vmem>>, vector<128x128xf32>
    %cst_9 = arith.constant dense<0.000000e+00> : vector<8x128xf32>
    %10 = tpu.matmul %7, %9, %cst_9 {dimension_numbers = #tpu.dot_dimension_numbers<[1], [0], [0], [1], [0, 0, 1, 1], [], []>} : vector<8x128xf32>, vector<128x128xf32>, vector<8x128xf32> -> vector<8x128xf32>
    %c1 = arith.constant 1 : index
    %c0_10 = arith.constant 0 : index
    %11 = vector.load %arg2[%c1, %c0_10] : memref<8x128xf32, #tpu.memory_space<vmem>>, vector<1x128xf32>
    %12 = vector.broadcast %11 : vector<1x128xf32> to vector<8x128xf32>
    %13 = arith.addf %10, %12 : vector<8x128xf32>
    %cst_11 = arith.constant 0.000000e+00 : f32
    %14 = vector.broadcast %cst_11 : f32 to vector<8x128xf32>
    %15 = arith.maximumf %13, %14 : vector<8x128xf32>
    %c0_12 = arith.constant 0 : index
    %c256 = arith.constant 256 : index
    %16 = vector.load %arg11[%c0_12, %c256] : memref<8x640xf32, #tpu.memory_space<vmem>>, vector<8x128xf32>
    tpu.vector_store %arg11[%c0_12, %c256], %15 {strides = array<i32>} : memref<8x640xf32, #tpu.memory_space<vmem>>, vector<8x128xf32>,
    %c0_13 = arith.constant 0 : index
    %c0_14 = arith.constant 0 : index
    %17 = vector.load %arg5[%c0_13, %c0_14] : memref<128x128xf32, #tpu.memory_space<vmem>>, vector<128x128xf32>
    %cst_15 = arith.constant dense<0.000000e+00> : vector<8x128xf32>
    %18 = tpu.matmul %15, %17, %cst_15 {dimension_numbers = #tpu.dot_dimension_numbers<[1], [0], [0], [1], [0, 0, 1, 1], [], []>} : vector<8x128xf32>, vector<128x128xf32>, vector<8x128xf32> -> vector<8x128xf32>
    %c2 = arith.constant 2 : index
    %c0_16 = arith.constant 0 : index
    %19 = vector.load %arg2[%c2, %c0_16] : memref<8x128xf32, #tpu.memory_space<vmem>>, vector<1x128xf32>
    %20 = vector.broadcast %19 : vector<1x128xf32> to vector<8x128xf32>
    %21 = arith.addf %18, %20 : vector<8x128xf32>
    %cst_17 = arith.constant 0.000000e+00 : f32
    %22 = vector.broadcast %cst_17 : f32 to vector<8x128xf32>
    %23 = arith.maximumf %21, %22 : vector<8x128xf32>
    %c0_18 = arith.constant 0 : index
    %c384 = arith.constant 384 : index
    %24 = vector.load %arg11[%c0_18, %c384] : memref<8x640xf32, #tpu.memory_space<vmem>>, vector<8x128xf32>
    tpu.vector_store %arg11[%c0_18, %c384], %23 {strides = array<i32>} : memref<8x640xf32, #tpu.memory_space<vmem>>, vector<8x128xf32>,
    %c0_19 = arith.constant 0 : index
    %c0_20 = arith.constant 0 : index
    %25 = vector.load %arg6[%c0_19, %c0_20] : memref<128x128xf32, #tpu.memory_space<vmem>>, vector<128x128xf32>
    %cst_21 = arith.constant dense<0.000000e+00> : vector<8x128xf32>
    %26 = tpu.matmul %23, %25, %cst_21 {dimension_numbers = #tpu.dot_dimension_numbers<[1], [0], [0], [1], [0, 0, 1, 1], [], []>} : vector<8x128xf32>, vector<128x128xf32>, vector<8x128xf32> -> vector<8x128xf32>
    %c3 = arith.constant 3 : index
    %c0_22 = arith.constant 0 : index
    %27 = vector.load %arg2[%c3, %c0_22] : memref<8x128xf32, #tpu.memory_space<vmem>>, vector<1x128xf32>
    %28 = vector.broadcast %27 : vector<1x128xf32> to vector<8x128xf32>
    %29 = arith.addf %26, %28 : vector<8x128xf32>
    %c0_23 = arith.constant 0 : index
    %c512 = arith.constant 512 : index
    %30 = vector.load %arg11[%c0_23, %c512] : memref<8x640xf32, #tpu.memory_space<vmem>>, vector<8x128xf32>
    tpu.vector_store %arg11[%c0_23, %c512], %29 {strides = array<i32>} : memref<8x640xf32, #tpu.memory_space<vmem>>, vector<8x128xf32>,
    %c0_24 = arith.constant 0 : index
    %c0_25 = arith.constant 0 : index
    %31 = vector.load %arg7[%c0_24, %c0_25] : memref<128x128xf32, #tpu.memory_space<vmem>>, vector<128x128xf32>
    %cst_26 = arith.constant dense<0.000000e+00> : vector<8x128xf32>
    %32 = tpu.matmul %29, %31, %cst_26 {dimension_numbers = #tpu.dot_dimension_numbers<[1], [0], [0], [1], [0, 0, 1, 1], [], []>} : vector<8x128xf32>, vector<128x128xf32>, vector<8x128xf32> -> vector<8x128xf32>
    %c4 = arith.constant 4 : index
    %c0_27 = arith.constant 0 : index
    %33 = vector.load %arg2[%c4, %c0_27] : memref<8x128xf32, #tpu.memory_space<vmem>>, vector<1x128xf32>
    %34 = vector.broadcast %33 : vector<1x128xf32> to vector<8x128xf32>
    %35 = arith.addf %32, %34 : vector<8x128xf32>
    %cst_28 = arith.constant 0.000000e+00 : f32
    %36 = vector.broadcast %cst_28 : f32 to vector<8x128xf32>
    %37 = arith.maximumf %35, %36 : vector<8x128xf32>
    %c0_29 = arith.constant 0 : index
    %c0_30 = arith.constant 0 : index
    %38 = vector.load %arg8[%c0_29, %c0_30] : memref<128x128xf32, #tpu.memory_space<vmem>>, vector<128x128xf32>
    %cst_31 = arith.constant dense<0.000000e+00> : vector<8x128xf32>
    %39 = tpu.matmul %37, %38, %cst_31 {dimension_numbers = #tpu.dot_dimension_numbers<[1], [0], [0], [1], [0, 0, 1, 1], [], []>} : vector<8x128xf32>, vector<128x128xf32>, vector<8x128xf32> -> vector<8x128xf32>
    %c5 = arith.constant 5 : index
    %c0_32 = arith.constant 0 : index
    %40 = vector.load %arg2[%c5, %c0_32] : memref<8x128xf32, #tpu.memory_space<vmem>>, vector<1x128xf32>
    %41 = vector.broadcast %40 : vector<1x128xf32> to vector<8x128xf32>
    %42 = arith.addf %39, %41 : vector<8x128xf32>
    %cst_33 = arith.constant 0.000000e+00 : f32
    %43 = vector.broadcast %cst_33 : f32 to vector<8x128xf32>
    %44 = arith.maximumf %42, %43 : vector<8x128xf32>
    %c0_34 = arith.constant 0 : index
    %c0_35 = arith.constant 0 : index
    %45 = vector.load %arg9[%c0_34, %c0_35] : memref<128x128xf32, #tpu.memory_space<vmem>>, vector<128x128xf32>
    %cst_36 = arith.constant dense<0.000000e+00> : vector<8x128xf32>
    %46 = tpu.matmul %44, %45, %cst_36 {dimension_numbers = #tpu.dot_dimension_numbers<[1], [0], [0], [1], [0, 0, 1, 1], [], []>} : vector<8x128xf32>, vector<128x128xf32>, vector<8x128xf32> -> vector<8x128xf32>
    %c6 = arith.constant 6 : index
    %c0_37 = arith.constant 0 : index
    %47 = vector.load %arg2[%c6, %c0_37] : memref<8x128xf32, #tpu.memory_space<vmem>>, vector<1x128xf32>
    %48 = vector.broadcast %47 : vector<1x128xf32> to vector<8x128xf32>
    %49 = arith.addf %46, %48 : vector<8x128xf32>
    %cst_38 = arith.constant 0.000000e+00 : f32
    %50 = vector.broadcast %cst_38 : f32 to vector<8x128xf32>
    %51 = arith.maximumf %49, %50 : vector<8x128xf32>
    %c0_39 = arith.constant 0 : index
    %c0_40 = arith.constant 0 : index
    %52 = vector.load %arg10[%c0_39, %c0_40] : memref<128x128xf32, #tpu.memory_space<vmem>>, vector<128x128xf32>
    %cst_41 = arith.constant dense<0.000000e+00> : vector<8x128xf32>
    %53 = tpu.matmul %51, %52, %cst_41 {dimension_numbers = #tpu.dot_dimension_numbers<[1], [0], [0], [1], [0, 0, 1, 1], [], []>} : vector<8x128xf32>, vector<128x128xf32>, vector<8x128xf32> -> vector<8x128xf32>
    %c7 = arith.constant 7 : index
    %c0_42 = arith.constant 0 : index
    %54 = vector.load %arg2[%c7, %c0_42] : memref<8x128xf32, #tpu.memory_space<vmem>>, vector<1x128xf32>
    %55 = vector.broadcast %54 : vector<1x128xf32> to vector<8x128xf32>
    %56 = arith.addf %53, %55 : vector<8x128xf32>
    %c0_43 = arith.constant 0 : index
    %c0_44 = arith.constant 0 : index
    %57 = vector.load %arg11[%c0_43, %c0_44] : memref<8x640xf32, #tpu.memory_space<vmem>>, vector<8x128xf32>
    tpu.vector_store %arg11[%c0_43, %c0_44], %56 {strides = array<i32>} : memref<8x640xf32, #tpu.memory_space<vmem>>, vector<8x128xf32>,
    return
  }
  func.func @transform_0(%arg0: i32) -> (i32, i32) {
    %c0_i32 = arith.constant 0 : i32
    %c0_i32_0 = arith.constant 0 : i32
    return %arg0, %c0_i32 : i32, i32
  }
  func.func @transform_1(%arg0: i32) -> (i32, i32) {
    %c0_i32 = arith.constant 0 : i32
    %c0_i32_0 = arith.constant 0 : i32
    %c0_i32_1 = arith.constant 0 : i32
    return %c0_i32, %c0_i32_0 : i32, i32
  }
  func.func @transform_2(%arg0: i32) -> (i32, i32) {
    %c0_i32 = arith.constant 0 : i32
    %c0_i32_0 = arith.constant 0 : i32
    %c0_i32_1 = arith.constant 0 : i32
    return %c0_i32, %c0_i32_0 : i32, i32
  }
  func.func @transform_3(%arg0: i32) -> (i32, i32) {
    %c0_i32 = arith.constant 0 : i32
    %c0_i32_0 = arith.constant 0 : i32
    %c0_i32_1 = arith.constant 0 : i32
    return %c0_i32, %c0_i32_0 : i32, i32
  }
  func.func @transform_4(%arg0: i32) -> (i32, i32) {
    %c0_i32 = arith.constant 0 : i32
    %c0_i32_0 = arith.constant 0 : i32
    %c0_i32_1 = arith.constant 0 : i32
    return %c0_i32, %c0_i32_0 : i32, i32
  }
  func.func @transform_5(%arg0: i32) -> (i32, i32) {
    %c0_i32 = arith.constant 0 : i32
    %c0_i32_0 = arith.constant 0 : i32
    %c0_i32_1 = arith.constant 0 : i32
    return %c0_i32, %c0_i32_0 : i32, i32
  }
  func.func @transform_6(%arg0: i32) -> (i32, i32) {
    %c0_i32 = arith.constant 0 : i32
    %c0_i32_0 = arith.constant 0 : i32
    %c0_i32_1 = arith.constant 0 : i32
    return %c0_i32, %c0_i32_0 : i32, i32
  }
  func.func @transform_7(%arg0: i32) -> (i32, i32) {
    %c0_i32 = arith.constant 0 : i32
    %c0_i32_0 = arith.constant 0 : i32
    %c0_i32_1 = arith.constant 0 : i32
    return %c0_i32, %c0_i32_0 : i32, i32
  }
  func.func @transform_8(%arg0: i32) -> (i32, i32) {
    %c0_i32 = arith.constant 0 : i32
    %c0_i32_0 = arith.constant 0 : i32
    %c0_i32_1 = arith.constant 0 : i32
    return %c0_i32, %c0_i32_0 : i32, i32
  }
  func.func @transform_9(%arg0: i32) -> (i32, i32) {
    %c0_i32 = arith.constant 0 : i32
    %c0_i32_0 = arith.constant 0 : i32
    %c0_i32_1 = arith.constant 0 : i32
    return %c0_i32, %c0_i32_0 : i32, i32
  }
  func.func @transform_10(%arg0: i32) -> (i32, i32) {
    %c0_i32 = arith.constant 0 : i32
    %c0_i32_0 = arith.constant 0 : i32
    return %arg0, %c0_i32 : i32, i32
  }
}

</mosaic_0001>

<llo_original>
// kernel: tpu_custom_call.1
$region0: #{tpu_custom_call.1}
  #allocation0 [shape = 'u32[]', space=smem, size = 0x4, offset = 0x4, fixed_abs, tag = 'smem constant byte address 0x4 - core index']
  #allocation1 [shape = 'u32[72,128]{1,0:T(1,128)}', space=vmem, size = 0x9000, scoped, tag = 'internal scratch']
  %s0 = inlined_call_operand.hbm [shape: f32[16,128], index: 0, kind: input, shape index: {}]
  %s1 = inlined_call_operand.hbm [shape: f32[8,128], index: 1, kind: input, shape index: {}]
  %s2 = inlined_call_operand.hbm [shape: f32[128,128], index: 2, kind: input, shape index: {}]
  %s3 = inlined_call_operand.hbm [shape: f32[128,128], index: 3, kind: input, shape index: {}]
  %s4 = inlined_call_operand.hbm [shape: f32[128,128], index: 4, kind: input, shape index: {}]
  %s5 = inlined_call_operand.hbm [shape: f32[128,128], index: 5, kind: input, shape index: {}]
  %s6 = inlined_call_operand.hbm [shape: f32[128,128], index: 6, kind: input, shape index: {}]
  %s7 = inlined_call_operand.hbm [shape: f32[128,128], index: 7, kind: input, shape index: {}]
  %s8 = inlined_call_operand.hbm [shape: f32[128,128], index: 8, kind: input, shape index: {}]
  %s9 = inlined_call_operand.hbm [shape: f32[128,128], index: 9, kind: input, shape index: {}]
  %s10 = inlined_call_operand.hbm [shape: f32[16,640], index: 10, kind: output, shape index: {}]
  %s11 = sld [smem:[#allocation0]]
  $region113: #{tpu_custom_call.1} parent=0
    _
  %s13 = ssub.s32 1, %s11
  %s14 = scalar_select 0, %s13, %s11
  $region1: #{tpu_custom_call.1} parent=0
    #allocation2 [shape = 'u8[8192]{0}', space=vmem, size = 0x2000, scoped, tag = 'input window, operand 0']
    #allocation3 [shape = 's32[2]{0}', space=sflag, size = 0x8, scoped, tag = 'scoped memory for tpu_custom_call.1']
    #allocation4 [shape = 's32[2]{0}', space=sflag, size = 0x8, scoped, tag = 'scoped memory for tpu_custom_call.1']
    #allocation5 [shape = 'u8[4096]{0}', space=vmem, size = 0x1000, scoped, tag = 'input window, operand 1, single buffered']
    #allocation6 [shape = 's32[1]{0}', space=sflag, size = 0x4, scoped, tag = 'scoped memory for tpu_custom_call.1']
    #allocation7 [shape = 'u8[65536]{0}', space=vmem, size = 0x10000, scoped, tag = 'input window, operand 2, single buffered']
    #allocation8 [shape = 'u8[65536]{0}', space=vmem, size = 0x10000, scoped, tag = 'input window, operand 3, single buffered']
    #allocation9 [shape = 's32[1]{0}', space=sflag, size = 0x4, scoped, tag = 'scoped memory for tpu_custom_call.1']
    #allocation10 [shape = 'u8[65536]{0}', space=vmem, size = 0x10000, scoped, tag = 'input window, operand 4, single buffered']
    #allocation11 [shape = 'u8[65536]{0}', space=vmem, size = 0x10000, scoped, tag = 'input window, operand 5, single buffered']
    #allocation12 [shape = 's32[1]{0}', space=sflag, size = 0x4, scoped, tag = 'scoped memory for tpu_custom_call.1']
    #allocation13 [shape = 'u8[65536]{0}', space=vmem, size = 0x10000, scoped, tag = 'input window, operand 6, single buffered']
    #allocation14 [shape = 'u8[65536]{0}', space=vmem, size = 0x10000, scoped, tag = 'input window, operand 7, single buffered']
    #allocation15 [shape = 's32[1]{0}', space=sflag, size = 0x4, scoped, tag = 'scoped memory for tpu_custom_call.1']
    #allocation16 [shape = 'u8[65536]{0}', space=vmem, size = 0x10000, scoped, tag = 'input window, operand 8, single buffered']
    #allocation17 [shape = 'u8[65536]{0}', space=vmem, size = 0x10000, scoped, tag = 'input window, operand 9, single buffered']
    #allocation18 [shape = 's32[1]{0}', space=sflag, size = 0x4, scoped, tag = 'scoped memory for tpu_custom_call.1']
    #allocation19 [shape = 'u8[40960]{0}', space=vmem, size = 0xa000, scoped, tag = 'output window, operand 0']
    %15 = vsyncpa [#allocation3], 0
    %s16 = scalar_lea.sflag [#allocation3], 1
    %17 = vsyncpa %s16, 0
    %18 = vsyncpa [#allocation6], 0
    %19 = vsyncpa [#allocation9], 0
    %20 = vsyncpa [#allocation12], 0
    %21 = vsyncpa [#allocation15], 0
    %22 = vsyncpa [#allocation18], 0
    %23 = vsyncpa [#allocation4], 0
    %s24 = scalar_lea.sflag [#allocation4], 1
    %25 = vsyncpa %s24, 0
    loop: start=0, step=1, limit=4
    $region2: #{tpu_custom_call.1} parent=1 // loop_pre_header
      _
    $region3: #{tpu_custom_call.1} parent=1 // loop_header
      %s27 = sphi 0, %s31
      %p28 = scmp.ge.s32.totalorder %s27, 4
      %s37 = sphi 0, %s39
      %s40 = sphi 0, %s37
      %s41 = sphi 0, %s40
      %s57 = sphi 0, %s41
      %s61 = sphi 0, %s61
      %s63 = sphi 0, %s61
      %s64 = sphi 0, %s63
      %s78 = sphi 0, %s64
      %s82 = sphi 0, %s82
      %s84 = sphi 0, %s82
      %s85 = sphi 0, %s84
      %s99 = sphi 0, %s85
      %s103 = sphi 0, %s103
      %s105 = sphi 0, %s103
      %s106 = sphi 0, %s105
      %s120 = sphi 0, %s106
      %s124 = sphi 0, %s124
      %s126 = sphi 0, %s124
      %s127 = sphi 0, %s126
      %s141 = sphi 0, %s127
      %s145 = sphi 0, %s145
      %s147 = sphi 0, %s145
      %s148 = sphi 0, %s147
      %s162 = sphi 0, %s148
      %s166 = sphi 0, %s166
      %s168 = sphi 0, %s166
      %s169 = sphi 0, %s168
      %s183 = sphi 0, %s169
      %s187 = sphi 0, %s187
      %s189 = sphi 0, %s187
      %s190 = sphi 0, %s189
      %s204 = sphi 0, %s190
      %s208 = sphi 0, %s208
      %s210 = sphi 0, %s208
      %s211 = sphi 0, %s210
      %s225 = sphi 0, %s211
      %s229 = sphi 0, %s229
      %s231 = sphi 0, %s229
      %s232 = sphi 0, %s231
      %s246 = sphi 0, %s232
      %s252 = sphi 0, %s254
      %s255 = sphi 0, %s252
      %s256 = sphi 0, %s255
      %s272 = sphi 0, %s256
    $region4: #{tpu_custom_call.1} parent=1 // loop_header_branch
      %30 = sbr.rel (%p28) target = $region8
    $region5: #{tpu_custom_call.1} parent=1 // loop_body
      %s32 = ssub.s32 %s27, 1
      %s33 = ssub.s32 %s27, 2
      %s34 = sadd.s32 %s27, 1
      %s35 = ssub.s32 %s27, %s34
      %p36 = scmp.eq.s32.totalorder %s35, 0
      %s38 = sadd.s32 %s37, 1
      %s39 = scalar_select %p36, %s37, %s38
      %p42 = pneg %p36
      %p43 = scmp.eq.s32.totalorder %s27, 1
      %p44 = por %p42, %p43
      %p45 = scmp.ne.s32.totalorder %s37, %s40
      %p46 = scmp.eq.s32.totalorder %s27, 0
      %p47 = por %p45, %p46
      %p48 = scmp.ne.s32.totalorder %s37, %s40
      %p49 = scmp.eq.s32.totalorder %s32, 1
      %p50 = por %p48, %p49
      %p51 = scmp.ne.s32.totalorder %s40, %s41
      %p52 = scmp.eq.s32.totalorder %s32, 0
      %p53 = por %p51, %p52
      %p54 = scmp.ne.s32.totalorder %s40, %s41
      %p55 = scmp.eq.s32.totalorder %s33, 1
      %p56 = por %p54, %p55
      %p58 = scmp.ne.s32.totalorder %s41, %s57
      %p59 = scmp.eq.s32.totalorder %s33, 0
      %p60 = por %p58, %p59
      %s62 = sadd.s32 %s61, 1
      %p65 = scmp.eq.s32.totalorder %s27, 1
      %p66 = scmp.ne.s32.totalorder %s61, %s63
      %p67 = scmp.eq.s32.totalorder %s27, 0
      %p68 = por %p66, %p67
      %p69 = scmp.ne.s32.totalorder %s61, %s63
      %p70 = scmp.eq.s32.totalorder %s32, 1
      %p71 = por %p69, %p70
      %p72 = scmp.ne.s32.totalorder %s63, %s64
      %p73 = scmp.eq.s32.totalorder %s32, 0
      %p74 = por %p72, %p73
      %p75 = scmp.ne.s32.totalorder %s63, %s64
      %p76 = scmp.eq.s32.totalorder %s33, 1
      %p77 = por %p75, %p76
      %p79 = scmp.ne.s32.totalorder %s64, %s78
      %p80 = scmp.eq.s32.totalorder %s33, 0
      %p81 = por %p79, %p80
      %s83 = sadd.s32 %s82, 1
      %p86 = scmp.eq.s32.totalorder %s27, 1
      %p87 = scmp.ne.s32.totalorder %s82, %s84
      %p88 = scmp.eq.s32.totalorder %s27, 0
      %p89 = por %p87, %p88
      %p90 = scmp.ne.s32.totalorder %s82, %s84
      %p91 = scmp.eq.s32.totalorder %s32, 1
      %p92 = por %p90, %p91
      %p93 = scmp.ne.s32.totalorder %s84, %s85
      %p94 = scmp.eq.s32.totalorder %s32, 0
      %p95 = por %p93, %p94
      %p96 = scmp.ne.s32.totalorder %s84, %s85
      %p97 = scmp.eq.s32.totalorder %s33, 1
      %p98 = por %p96, %p97
      %p100 = scmp.ne.s32.totalorder %s85, %s99
      %p101 = scmp.eq.s32.totalorder %s33, 0
      %p102 = por %p100, %p101
      %s104 = sadd.s32 %s103, 1
      %p107 = scmp.eq.s32.totalorder %s27, 1
      %p108 = scmp.ne.s32.totalorder %s103, %s105
      %p109 = scmp.eq.s32.totalorder %s27, 0
      %p110 = por %p108, %p109
      %p111 = scmp.ne.s32.totalorder %s103, %s105
      %p112 = scmp.eq.s32.totalorder %s32, 1
      %p113 = por %p111, %p112
      %p114 = scmp.ne.s32.totalorder %s105, %s106
      %p115 = scmp.eq.s32.totalorder %s32, 0
      %p116 = por %p114, %p115
      %p117 = scmp.ne.s32.totalorder %s105, %s106
      %p118 = scmp.eq.s32.totalorder %s33, 1
      %p119 = por %p117, %p118
      %p121 = scmp.ne.s32.totalorder %s106, %s120
      %p122 = scmp.eq.s32.totalorder %s33, 0
      %p123 = por %p121, %p122
      %s125 = sadd.s32 %s124, 1
      %p128 = scmp.eq.s32.totalorder %s27, 1
      %p129 = scmp.ne.s32.totalorder %s124, %s126
      %p130 = scmp.eq.s32.totalorder %s27, 0
      %p131 = por %p129, %p130
      %p132 = scmp.ne.s32.totalorder %s124, %s126
      %p133 = scmp.eq.s32.totalorder %s32, 1
      %p134 = por %p132, %p133
      %p135 = scmp.ne.s32.totalorder %s126, %s127
      %p136 = scmp.eq.s32.totalorder %s32, 0
      %p137 = por %p135, %p136
      %p138 = scmp.ne.s32.totalorder %s126, %s127
      %p139 = scmp.eq.s32.totalorder %s33, 1
      %p140 = por %p138, %p139
      %p142 = scmp.ne.s32.totalorder %s127, %s141
      %p143 = scmp.eq.s32.totalorder %s33, 0
      %p144 = por %p142, %p143
      %s146 = sadd.s32 %s145, 1
      %p149 = scmp.eq.s32.totalorder %s27, 1
      %p150 = scmp.ne.s32.totalorder %s145, %s147
      %p151 = scmp.eq.s32.totalorder %s27, 0
      %p152 = por %p150, %p151
      %p153 = scmp.ne.s32.totalorder %s145, %s147
      %p154 = scmp.eq.s32.totalorder %s32, 1
      %p155 = por %p153, %p154
      %p156 = scmp.ne.s32.totalorder %s147, %s148
      %p157 = scmp.eq.s32.totalorder %s32, 0
      %p158 = por %p156, %p157
      %p159 = scmp.ne.s32.totalorder %s147, %s148
      %p160 = scmp.eq.s32.totalorder %s33, 1
      %p161 = por %p159, %p160
      %p163 = scmp.ne.s32.totalorder %s148, %s162
      %p164 = scmp.eq.s32.totalorder %s33, 0
      %p165 = por %p163, %p164
      %s167 = sadd.s32 %s166, 1
      %p170 = scmp.eq.s32.totalorder %s27, 1
      %p171 = scmp.ne.s32.totalorder %s166, %s168
      %p172 = scmp.eq.s32.totalorder %s27, 0
      %p173 = por %p171, %p172
      %p174 = scmp.ne.s32.totalorder %s166, %s168
      %p175 = scmp.eq.s32.totalorder %s32, 1
      %p176 = por %p174, %p175
      %p177 = scmp.ne.s32.totalorder %s168, %s169
      %p178 = scmp.eq.s32.totalorder %s32, 0
      %p179 = por %p177, %p178
      %p180 = scmp.ne.s32.totalorder %s168, %s169
      %p181 = scmp.eq.s32.totalorder %s33, 1
      %p182 = por %p180, %p181
      %p184 = scmp.ne.s32.totalorder %s169, %s183
      %p185 = scmp.eq.s32.totalorder %s33, 0
      %p186 = por %p184, %p185
      %s188 = sadd.s32 %s187, 1
      %p191 = scmp.eq.s32.totalorder %s27, 1
      %p192 = scmp.ne.s32.totalorder %s187, %s189
      %p193 = scmp.eq.s32.totalorder %s27, 0
      %p194 = por %p192, %p193
      %p195 = scmp.ne.s32.totalorder %s187, %s189
      %p196 = scmp.eq.s32.totalorder %s32, 1
      %p197 = por %p195, %p196
      %p198 = scmp.ne.s32.totalorder %s189, %s190
      %p199 = scmp.eq.s32.totalorder %s32, 0
      %p200 = por %p198, %p199
      %p201 = scmp.ne.s32.totalorder %s189, %s190
      %p202 = scmp.eq.s32.totalorder %s33, 1
      %p203 = por %p201, %p202
      %p205 = scmp.ne.s32.totalorder %s190, %s204
      %p206 = scmp.eq.s32.totalorder %s33, 0
      %p207 = por %p205, %p206
      %s209 = sadd.s32 %s208, 1
      %p212 = scmp.eq.s32.totalorder %s27, 1
      %p213 = scmp.ne.s32.totalorder %s208, %s210
      %p214 = scmp.eq.s32.totalorder %s27, 0
      %p215 = por %p213, %p214
      %p216 = scmp.ne.s32.totalorder %s208, %s210
      %p217 = scmp.eq.s32.totalorder %s32, 1
      %p218 = por %p216, %p217
      %p219 = scmp.ne.s32.totalorder %s210, %s211
      %p220 = scmp.eq.s32.totalorder %s32, 0
      %p221 = por %p219, %p220
      %p222 = scmp.ne.s32.totalorder %s210, %s211
      %p223 = scmp.eq.s32.totalorder %s33, 1
      %p224 = por %p222, %p223
      %p226 = scmp.ne.s32.totalorder %s211, %s225
      %p227 = scmp.eq.s32.totalorder %s33, 0
      %p228 = por %p226, %p227
      %s230 = sadd.s32 %s229, 1
      %p233 = scmp.eq.s32.totalorder %s27, 1
      %p234 = scmp.ne.s32.totalorder %s229, %s231
      %p235 = scmp.eq.s32.totalorder %s27, 0
      %p236 = por %p234, %p235
      %p237 = scmp.ne.s32.totalorder %s229, %s231
      %p238 = scmp.eq.s32.totalorder %s32, 1
      %p239 = por %p237, %p238
      %p240 = scmp.ne.s32.totalorder %s231, %s232
      %p241 = scmp.eq.s32.totalorder %s32, 0
      %p242 = por %p240, %p241
      %p243 = scmp.ne.s32.totalorder %s231, %s232
      %p244 = scmp.eq.s32.totalorder %s33, 1
      %p245 = por %p243, %p244
      %p247 = scmp.ne.s32.totalorder %s232, %s246
      %p248 = scmp.eq.s32.totalorder %s33, 0
      %p249 = por %p247, %p248
      %s250 = ssub.s32 %s27, %s34
      %p251 = scmp.eq.s32.totalorder %s250, 0
      %s253 = sadd.s32 %s252, 1
      %s254 = scalar_select %p251, %s252, %s253
      %p257 = pneg %p251
      %p258 = scmp.eq.s32.totalorder %s27, 1
      %p259 = por %p257, %p258
      %p260 = scmp.ne.s32.totalorder %s252, %s255
      %p261 = scmp.eq.s32.totalorder %s27, 0
      %p262 = por %p260, %p261
      %p263 = scmp.ne.s32.totalorder %s252, %s255
      %p264 = scmp.eq.s32.totalorder %s32, 1
      %p265 = por %p263, %p264
      %p266 = scmp.ne.s32.totalorder %s255, %s256
      %p267 = scmp.eq.s32.totalorder %s32, 0
      %p268 = por %p266, %p267
      %p269 = scmp.ne.s32.totalorder %s255, %s256
      %p270 = scmp.eq.s32.totalorder %s33, 1
      %p271 = por %p269, %p270
      %p273 = scmp.ne.s32.totalorder %s256, %s272
      %p274 = scmp.eq.s32.totalorder %s33, 0
      %p275 = por %p273, %p274
      %p276 = scmp.le.s32.totalorder 1, %s27
      %p277 = scmp.lt.s32.totalorder %s27, 3
      %p278 = pnand %p276, %p277
      %p279 = pneg %p278
      // Predicated region
      $region9: #{tpu_custom_call.1} parent=5 // pred_check
        _
      $region10: #{tpu_custom_call.1} parent=5 // pred_check_branch
        %281 = sbr.rel (%p278) target = $region12
      $region11: #{tpu_custom_call.1} parent=5 // pred_region
        %s282 = ssub.s32 %s27, 1
        // Predicated region
        $region13: #{tpu_custom_call.1} parent=11 // pred_check
          %p283 = pneg %p74
        $region14: #{tpu_custom_call.1} parent=11 // pred_check_branch
          %285 = sbr.rel (%p283) target = $region16
        $region15: #{tpu_custom_call.1} parent=11 // pred_region
          %287 = vsyncadd [#allocation6], 0
          %s289 = sshll.u32 %s1, 4
          %s290 = int_to_ptr.hbm [resolvable:$true] %s289
          %s291 = sshll.u32 [#allocation5], 4
          %s292 = int_to_ptr.vmem [resolvable:$true] %s291
          %294 = dma.hbm_to_vmem [thread:$0]  %s290, 128, %s292, [#allocation6]
        $region16: #{tpu_custom_call.1} parent=11 // pred_fallthru
          _
        // Predicated region
        $region17: #{tpu_custom_call.1} parent=11 // pred_check
          %p295 = pneg %p95
        $region18: #{tpu_custom_call.1} parent=11 // pred_check_branch
          %297 = sbr.rel (%p295) target = $region20
        $region19: #{tpu_custom_call.1} parent=11 // pred_region
          %299 = vsyncadd [#allocation6], 0
          %s300 = sshll.u32 %s2, 4
          %s301 = int_to_ptr.hbm [resolvable:$true] %s300
          %s302 = sshll.u32 [#allocation7], 4
          %s303 = int_to_ptr.vmem [resolvable:$true] %s302
          %308 = dma.hbm_to_vmem [thread:$0]  %s301, 2048, %s303, [#allocation6], 128, 128, 8
        $region20: #{tpu_custom_call.1} parent=11 // pred_fallthru
          _
        // Predicated region
        $region21: #{tpu_custom_call.1} parent=11 // pred_check
          %p309 = pneg %p116
        $region22: #{tpu_custom_call.1} parent=11 // pred_check_branch
          %311 = sbr.rel (%p309) target = $region24
        $region23: #{tpu_custom_call.1} parent=11 // pred_region
          %313 = vsyncadd [#allocation9], 0
          %s314 = sshll.u32 %s3, 4
          %s315 = int_to_ptr.hbm [resolvable:$true] %s314
          %s316 = sshll.u32 [#allocation8], 4
          %s317 = int_to_ptr.vmem [resolvable:$true] %s316
          %322 = dma.hbm_to_vmem [thread:$0]  %s315, 2048, %s317, [#allocation9], 128, 128, 8
        $region24: #{tpu_custom_call.1} parent=11 // pred_fallthru
          _
        // Predicated region
        $region25: #{tpu_custom_call.1} parent=11 // pred_check
          %p323 = pneg %p137
        $region26: #{tpu_custom_call.1} parent=11 // pred_check_branch
          %325 = sbr.rel (%p323) target = $region28
        $region27: #{tpu_custom_call.1} parent=11 // pred_region
          %327 = vsyncadd [#allocation9], 0
          %s328 = sshll.u32 %s4, 4
          %s329 = int_to_ptr.hbm [resolvable:$true] %s328
          %s330 = sshll.u32 [#allocation10], 4
          %s331 = int_to_ptr.vmem [resolvable:$true] %s330
          %336 = dma.hbm_to_vmem [thread:$0]  %s329, 2048, %s331, [#allocation9], 128, 128, 8
        $region28: #{tpu_custom_call.1} parent=11 // pred_fallthru
          _
        // Predicated region
        $region29: #{tpu_custom_call.1} parent=11 // pred_check
          %p337 = pneg %p158
        $region30: #{tpu_custom_call.1} parent=11 // pred_check_branch
          %339 = sbr.rel (%p337) target = $region32
        $region31: #{tpu_custom_call.1} parent=11 // pred_region
          %341 = vsyncadd [#allocation12], 0
          %s342 = sshll.u32 %s5, 4
          %s343 = int_to_ptr.hbm [resolvable:$true] %s342
          %s344 = sshll.u32 [#allocation11], 4
          %s345 = int_to_ptr.vmem [resolvable:$true] %s344
          %350 = dma.hbm_to_vmem [thread:$0]  %s343, 2048, %s345, [#allocation12], 128, 128, 8
        $region32: #{tpu_custom_call.1} parent=11 // pred_fallthru
          _
        // Predicated region
        $region33: #{tpu_custom_call.1} parent=11 // pred_check
          %p351 = pneg %p179
        $region34: #{tpu_custom_call.1} parent=11 // pred_check_branch
          %353 = sbr.rel (%p351) target = $region36
        $region35: #{tpu_custom_call.1} parent=11 // pred_region
          %355 = vsyncadd [#allocation12], 0
          %s356 = sshll.u32 %s6, 4
          %s357 = int_to_ptr.hbm [resolvable:$true] %s356
          %s358 = sshll.u32 [#allocation13], 4
          %s359 = int_to_ptr.vmem [resolvable:$true] %s358
          %364 = dma.hbm_to_vmem [thread:$0]  %s357, 2048, %s359, [#allocation12], 128, 128, 8
        $region36: #{tpu_custom_call.1} parent=11 // pred_fallthru
          _
        // Predicated region
        $region37: #{tpu_custom_call.1} parent=11 // pred_check
          %p365 = pneg %p200
        $region38: #{tpu_custom_call.1} parent=11 // pred_check_branch
          %367 = sbr.rel (%p365) target = $region40
        $region39: #{tpu_custom_call.1} parent=11 // pred_region
          %369 = vsyncadd [#allocation15], 0
          %s370 = sshll.u32 %s7, 4
          %s371 = int_to_ptr.hbm [resolvable:$true] %s370
          %s372 = sshll.u32 [#allocation14], 4
          %s373 = int_to_ptr.vmem [resolvable:$true] %s372
          %378 = dma.hbm_to_vmem [thread:$0]  %s371, 2048, %s373, [#allocation15], 128, 128, 8
        $region40: #{tpu_custom_call.1} parent=11 // pred_fallthru
          _
        // Predicated region
        $region41: #{tpu_custom_call.1} parent=11 // pred_check
          %p379 = pneg %p221
        $region42: #{tpu_custom_call.1} parent=11 // pred_check_branch
          %381 = sbr.rel (%p379) target = $region44
        $region43: #{tpu_custom_call.1} parent=11 // pred_region
          %383 = vsyncadd [#allocation15], 0
          %s384 = sshll.u32 %s8, 4
          %s385 = int_to_ptr.hbm [resolvable:$true] %s384
          %s386 = sshll.u32 [#allocation16], 4
          %s387 = int_to_ptr.vmem [resolvable:$true] %s386
          %392 = dma.hbm_to_vmem [thread:$0]  %s385, 2048, %s387, [#allocation15], 128, 128, 8
        $region44: #{tpu_custom_call.1} parent=11 // pred_fallthru
          _
        // Predicated region
        $region45: #{tpu_custom_call.1} parent=11 // pred_check
          %p393 = pneg %p242
        $region46: #{tpu_custom_call.1} parent=11 // pred_check_branch
          %395 = sbr.rel (%p393) target = $region48
        $region47: #{tpu_custom_call.1} parent=11 // pred_region
          %397 = vsyncadd [#allocation18], 0
          %s398 = sshll.u32 %s9, 4
          %s399 = int_to_ptr.hbm [resolvable:$true] %s398
          %s400 = sshll.u32 [#allocation17], 4
          %s401 = int_to_ptr.vmem [resolvable:$true] %s400
          %406 = dma.hbm_to_vmem [thread:$0]  %s399, 2048, %s401, [#allocation18], 128, 128, 8
        $region48: #{tpu_custom_call.1} parent=11 // pred_fallthru
          _
      $region12: #{tpu_custom_call.1} parent=5 // pred_fallthru
        _
      %p407 = scmp.lt.s32.totalorder %s27, 2
      // Predicated region
      $region49: #{tpu_custom_call.1} parent=5 // pred_check
        %p408 = pneg %p407
      $region50: #{tpu_custom_call.1} parent=5 // pred_check_branch
        %410 = sbr.rel (%p408) target = $region52
      $region51: #{tpu_custom_call.1} parent=5 // pred_region
        // Predicated region
        $region53: #{tpu_custom_call.1} parent=51 // pred_check
          %p411 = pneg %p47
        $region54: #{tpu_custom_call.1} parent=51 // pred_check_branch
          %413 = sbr.rel (%p411) target = $region56
        $region55: #{tpu_custom_call.1} parent=51 // pred_region
          %s414 = sand.u32 %s37, 1
          %s415 = scalar_lea.sflag [#allocation3], %s414
          %s416 = sand.u32 %s37, 1
          %s417 = smul.addr %s416, 8
          %s418 = scalar_lea.vmem [#allocation2], %s417
          %420 = vsyncadd %s415, 0
          %s421 = smul.addr %s27, 8
          %s422 = scalar_lea.hbm %s0, %s421
          %s424 = sshll.u32 %s422, 4
          %s425 = int_to_ptr.hbm [resolvable:$true] %s424
          %s426 = sshll.u32 %s418, 4
          %s427 = int_to_ptr.vmem [resolvable:$true] %s426
          %429 = dma.hbm_to_vmem [thread:$0]  %s425, 128, %s427, %s415
        $region56: #{tpu_custom_call.1} parent=51 // pred_fallthru
          _
      $region52: #{tpu_custom_call.1} parent=5 // pred_fallthru
        _
      %p430 = scmp.le.s32.totalorder 1, %s27
      %p431 = scmp.lt.s32.totalorder %s27, 3
      %p432 = pnand %p430, %p431
      %p433 = pneg %p432
      // Predicated region
      $region57: #{tpu_custom_call.1} parent=5 // pred_check
        _
      $region58: #{tpu_custom_call.1} parent=5 // pred_check_branch
        %435 = sbr.rel (%p432) target = $region60
      $region59: #{tpu_custom_call.1} parent=5 // pred_region
        %s436 = ssub.s32 %s27, 1
        %s437 = sand.u32 %s40, 1
        %s438 = scalar_lea.sflag [#allocation3], %s437
        %s439 = sand.u32 %s40, 1
        %s440 = smul.addr %s439, 8
        %s441 = scalar_lea.vmem [#allocation2], %s440
        // Predicated region
        $region61: #{tpu_custom_call.1} parent=59 // pred_check
          %p442 = pneg %p53
        $region62: #{tpu_custom_call.1} parent=59 // pred_check_branch
          %444 = sbr.rel (%p442) target = $region64
        $region63: #{tpu_custom_call.1} parent=59 // pred_region
          %446 = dma.done %s438, 128
        $region64: #{tpu_custom_call.1} parent=59 // pred_fallthru
          _
        // Predicated region
        $region65: #{tpu_custom_call.1} parent=59 // pred_check
          %p447 = pneg %p74
        $region66: #{tpu_custom_call.1} parent=59 // pred_check_branch
          %449 = sbr.rel (%p447) target = $region68
        $region67: #{tpu_custom_call.1} parent=59 // pred_region
          %451 = dma.done [#allocation6], 128
        $region68: #{tpu_custom_call.1} parent=59 // pred_fallthru
          _
        // Predicated region
        $region69: #{tpu_custom_call.1} parent=59 // pred_check
          %p452 = pneg %p95
        $region70: #{tpu_custom_call.1} parent=59 // pred_check_branch
          %454 = sbr.rel (%p452) target = $region72
        $region71: #{tpu_custom_call.1} parent=59 // pred_region
          %456 = dma.done [#allocation6], 2048
        $region72: #{tpu_custom_call.1} parent=59 // pred_fallthru
          _
        // Predicated region
        $region73: #{tpu_custom_call.1} parent=59 // pred_check
          %p457 = pneg %p116
        $region74: #{tpu_custom_call.1} parent=59 // pred_check_branch
          %459 = sbr.rel (%p457) target = $region76
        $region75: #{tpu_custom_call.1} parent=59 // pred_region
          %461 = dma.done [#allocation9], 2048
        $region76: #{tpu_custom_call.1} parent=59 // pred_fallthru
          _
        // Predicated region
        $region77: #{tpu_custom_call.1} parent=59 // pred_check
          %p462 = pneg %p137
        $region78: #{tpu_custom_call.1} parent=59 // pred_check_branch
          %464 = sbr.rel (%p462) target = $region80
        $region79: #{tpu_custom_call.1} parent=59 // pred_region
          %466 = dma.done [#allocation9], 2048
        $region80: #{tpu_custom_call.1} parent=59 // pred_fallthru
          _
        // Predicated region
        $region81: #{tpu_custom_call.1} parent=59 // pred_check
          %p467 = pneg %p158
        $region82: #{tpu_custom_call.1} parent=59 // pred_check_branch
          %469 = sbr.rel (%p467) target = $region84
        $region83: #{tpu_custom_call.1} parent=59 // pred_region
          %471 = dma.done [#allocation12], 2048
        $region84: #{tpu_custom_call.1} parent=59 // pred_fallthru
          _
        // Predicated region
        $region85: #{tpu_custom_call.1} parent=59 // pred_check
          %p472 = pneg %p179
        $region86: #{tpu_custom_call.1} parent=59 // pred_check_branch
          %474 = sbr.rel (%p472) target = $region88
        $region87: #{tpu_custom_call.1} parent=59 // pred_region
          %476 = dma.done [#allocation12], 2048
        $region88: #{tpu_custom_call.1} parent=59 // pred_fallthru
          _
        // Predicated region
        $region89: #{tpu_custom_call.1} parent=59 // pred_check
          %p477 = pneg %p200
        $region90: #{tpu_custom_call.1} parent=59 // pred_check_branch
          %479 = sbr.rel (%p477) target = $region92
        $region91: #{tpu_custom_call.1} parent=59 // pred_region
          %481 = dma.done [#allocation15], 2048
        $region92: #{tpu_custom_call.1} parent=59 // pred_fallthru
          _
        // Predicated region
        $region93: #{tpu_custom_call.1} parent=59 // pred_check
          %p482 = pneg %p221
        $region94: #{tpu_custom_call.1} parent=59 // pred_check_branch
          %484 = sbr.rel (%p482) target = $region96
        $region95: #{tpu_custom_call.1} parent=59 // pred_region
          %486 = dma.done [#allocation15], 2048
        $region96: #{tpu_custom_call.1} parent=59 // pred_fallthru
          _
        // Predicated region
        $region97: #{tpu_custom_call.1} parent=59 // pred_check
          %p487 = pneg %p242
        $region98: #{tpu_custom_call.1} parent=59 // pred_check_branch
          %489 = sbr.rel (%p487) target = $region100
        $region99: #{tpu_custom_call.1} parent=59 // pred_region
          %491 = dma.done [#allocation18], 2048
        $region100: #{tpu_custom_call.1} parent=59 // pred_fallthru
          _
        %s492 = sand.u32 %s40, 1
        %s493 = scalar_lea.sflag [#allocation3], %s492
        %s494 = sand.u32 %s40, 1
        %s495 = smul.addr %s494, 8
        %s496 = scalar_lea.vmem [#allocation2], %s495
        %p497 = pneg %p53
        %p498 = pneg %p50
        %p499 = pneg %p74
        %p500 = pneg %p71
        %p501 = pneg %p95
        %p502 = pneg %p92
        %p503 = pneg %p116
        %p504 = pneg %p113
        %p505 = pneg %p137
        %p506 = pneg %p134
        %p507 = pneg %p158
        %p508 = pneg %p155
        %p509 = pneg %p179
        %p510 = pneg %p176
        %p511 = pneg %p200
        %p512 = pneg %p197
        %p513 = pneg %p221
        %p514 = pneg %p218
        %p515 = pneg %p242
        %p516 = pneg %p239
        %p517 = pneg %p268
        %p518 = pneg %p265
        %s519 = sand.u32 %s255, 1
        %s520 = scalar_lea.sflag [#allocation4], %s519
        %s521 = sand.u32 %s255, 1
        %s522 = smul.addr %s521, 40
        %s523 = scalar_lea.vmem [#allocation19], %s522
        %v524 = vld [vmem:[%s441] sm:$0xff]
        %v525 = vld [vmem:[#allocation7] sm:$0xff]
        %v526 = vld [vmem:[#allocation7 + $0x8] sm:$0xff]
        %v527 = vld [vmem:[#allocation7 + $0x10] sm:$0xff]
        %v528 = vld [vmem:[#allocation7 + $0x18] sm:$0xff]
        %v529 = vld [vmem:[#allocation7 + $0x20] sm:$0xff]
        %v530 = vld [vmem:[#allocation7 + $0x28] sm:$0xff]
        %v531 = vld [vmem:[#allocation7 + $0x30] sm:$0xff]
        %v532 = vld [vmem:[#allocation7 + $0x38] sm:$0xff]
        %v533 = vld [vmem:[#allocation7 + $0x40] sm:$0xff]
        %v534 = vld [vmem:[#allocation7 + $0x48] sm:$0xff]
        %v535 = vld [vmem:[#allocation7 + $0x50] sm:$0xff]
        %v536 = vld [vmem:[#allocation7 + $0x58] sm:$0xff]
        %v537 = vld [vmem:[#allocation7 + $0x60] sm:$0xff]
        %v538 = vld [vmem:[#allocation7 + $0x68] sm:$0xff]
        %v539 = vld [vmem:[#allocation7 + $0x70] sm:$0xff]
        %v540 = vld [vmem:[#allocation7 + $0x78] sm:$0xff]
        %v541 = vld [vmem:[#allocation5] sm:$0x1]
        %v542 = vperm.slane %v541, 0
        %543 = vmatpush.msra.mxu0 %v540
        %544 = vmatpush.msra.mxu0 %v539
        %545 = vmatpush.msra.mxu0 %v538
        %546 = vmatpush.msra.mxu0 %v537
        %547 = vmatpush.msra.mxu0 %v536
        %548 = vmatpush.msra.mxu0 %v535
        %549 = vmatpush.msra.mxu0 %v534
        %550 = vmatpush.msra.mxu0 %v533
        %551 = vmatpush.msra.mxu0 %v532
        %552 = vmatpush.msra.mxu0 %v531
        %553 = vmatpush.msra.mxu0 %v530
        %554 = vmatpush.msra.mxu0 %v529
        %555 = vmatpush.msra.mxu0 %v528
        %556 = vmatpush.msra.mxu0 %v527
        %557 = vmatpush.msra.mxu0 %v526
        %558 = vmatpush.msra.mxu0 %v525
        %559 = vmatmul.f32.gmra.mxu0 %v524
        %v560 = vpop.f32.mrf.mxu0
        %v561 = vadd.f32 %v542, %v560
        %562 = vdwg.mxu0
        %v563 = vmax.f32 %v561, 0.0
        %564 = vst [vmem:[%s523 + $0x8] sm:$0xff] %v563
        %v565 = vld [vmem:[#allocation8] sm:$0xff]
        %v566 = vld [vmem:[#allocation8 + $0x8] sm:$0xff]
        %v567 = vld [vmem:[#allocation8 + $0x10] sm:$0xff]
        %v568 = vld [vmem:[#allocation8 + $0x18] sm:$0xff]
        %v569 = vld [vmem:[#allocation8 + $0x20] sm:$0xff]
        %v570 = vld [vmem:[#allocation8 + $0x28] sm:$0xff]
        %v571 = vld [vmem:[#allocation8 + $0x30] sm:$0xff]
        %v572 = vld [vmem:[#allocation8 + $0x38] sm:$0xff]
        %v573 = vld [vmem:[#allocation8 + $0x40] sm:$0xff]
        %v574 = vld [vmem:[#allocation8 + $0x48] sm:$0xff]
        %v575 = vld [vmem:[#allocation8 + $0x50] sm:$0xff]
        %v576 = vld [vmem:[#allocation8 + $0x58] sm:$0xff]
        %v577 = vld [vmem:[#allocation8 + $0x60] sm:$0xff]
        %v578 = vld [vmem:[#allocation8 + $0x68] sm:$0xff]
        %v579 = vld [vmem:[#allocation8 + $0x70] sm:$0xff]
        %v580 = vld [vmem:[#allocation8 + $0x78] sm:$0xff]
        %v581 = vld [vmem:[#allocation5 + $0x1] sm:$0x1]
        %v582 = vperm.slane %v581, 0
        %583 = vmatpush.msra.mxu0 %v580
        %584 = vmatpush.msra.mxu0 %v579
        %585 = vmatpush.msra.mxu0 %v578
        %586 = vmatpush.msra.mxu0 %v577
        %587 = vmatpush.msra.mxu0 %v576
        %588 = vmatpush.msra.mxu0 %v575
        %589 = vmatpush.msra.mxu0 %v574
        %590 = vmatpush.msra.mxu0 %v573
        %591 = vmatpush.msra.mxu0 %v572
        %592 = vmatpush.msra.mxu0 %v571
        %593 = vmatpush.msra.mxu0 %v570
        %594 = vmatpush.msra.mxu0 %v569
        %595 = vmatpush.msra.mxu0 %v568
        %596 = vmatpush.msra.mxu0 %v567
        %597 = vmatpush.msra.mxu0 %v566
        %598 = vmatpush.msra.mxu0 %v565
        %599 = vmatmul.f32.gmra.mxu0 %v563
        %v600 = vpop.f32.mrf.mxu0
        %v601 = vadd.f32 %v582, %v600
        %602 = vdwg.mxu0
        %v603 = vmax.f32 %v601, 0.0
        %604 = vst [vmem:[%s523 + $0x10] sm:$0xff] %v603
        %v605 = vld [vmem:[#allocation10] sm:$0xff]
        %v606 = vld [vmem:[#allocation10 + $0x8] sm:$0xff]
        %v607 = vld [vmem:[#allocation10 + $0x10] sm:$0xff]
        %v608 = vld [vmem:[#allocation10 + $0x18] sm:$0xff]
        %v609 = vld [vmem:[#allocation10 + $0x20] sm:$0xff]
        %v610 = vld [vmem:[#allocation10 + $0x28] sm:$0xff]
        %v611 = vld [vmem:[#allocation10 + $0x30] sm:$0xff]
        %v612 = vld [vmem:[#allocation10 + $0x38] sm:$0xff]
        %v613 = vld [vmem:[#allocation10 + $0x40] sm:$0xff]
        %v614 = vld [vmem:[#allocation10 + $0x48] sm:$0xff]
        %v615 = vld [vmem:[#allocation10 + $0x50] sm:$0xff]
        %v616 = vld [vmem:[#allocation10 + $0x58] sm:$0xff]
        %v617 = vld [vmem:[#allocation10 + $0x60] sm:$0xff]
        %v618 = vld [vmem:[#allocation10 + $0x68] sm:$0xff]
        %v619 = vld [vmem:[#allocation10 + $0x70] sm:$0xff]
        %v620 = vld [vmem:[#allocation10 + $0x78] sm:$0xff]
        %v621 = vld [vmem:[#allocation5 + $0x2] sm:$0x1]
        %v622 = vperm.slane %v621, 0
        %623 = vmatpush.msra.mxu0 %v620
        %624 = vmatpush.msra.mxu0 %v619
        %625 = vmatpush.msra.mxu0 %v618
        %626 = vmatpush.msra.mxu0 %v617
        %627 = vmatpush.msra.mxu0 %v616
        %628 = vmatpush.msra.mxu0 %v615
        %629 = vmatpush.msra.mxu0 %v614
        %630 = vmatpush.msra.mxu0 %v613
        %631 = vmatpush.msra.mxu0 %v612
        %632 = vmatpush.msra.mxu0 %v611
        %633 = vmatpush.msra.mxu0 %v610
        %634 = vmatpush.msra.mxu0 %v609
        %635 = vmatpush.msra.mxu0 %v608
        %636 = vmatpush.msra.mxu0 %v607
        %637 = vmatpush.msra.mxu0 %v606
        %638 = vmatpush.msra.mxu0 %v605
        %639 = vmatmul.f32.gmra.mxu0 %v603
        %v640 = vpop.f32.mrf.mxu0
        %v641 = vadd.f32 %v622, %v640
        %642 = vdwg.mxu0
        %v643 = vmax.f32 %v641, 0.0
        %644 = vst [vmem:[%s523 + $0x18] sm:$0xff] %v643
        %v645 = vld [vmem:[#allocation11] sm:$0xff]
        %v646 = vld [vmem:[#allocation11 + $0x8] sm:$0xff]
        %v647 = vld [vmem:[#allocation11 + $0x10] sm:$0xff]
        %v648 = vld [vmem:[#allocation11 + $0x18] sm:$0xff]
        %v649 = vld [vmem:[#allocation11 + $0x20] sm:$0xff]
        %v650 = vld [vmem:[#allocation11 + $0x28] sm:$0xff]
        %v651 = vld [vmem:[#allocation11 + $0x30] sm:$0xff]
        %v652 = vld [vmem:[#allocation11 + $0x38] sm:$0xff]
        %v653 = vld [vmem:[#allocation11 + $0x40] sm:$0xff]
        %v654 = vld [vmem:[#allocation11 + $0x48] sm:$0xff]
        %v655 = vld [vmem:[#allocation11 + $0x50] sm:$0xff]
        %v656 = vld [vmem:[#allocation11 + $0x58] sm:$0xff]
        %v657 = vld [vmem:[#allocation11 + $0x60] sm:$0xff]
        %v658 = vld [vmem:[#allocation11 + $0x68] sm:$0xff]
        %v659 = vld [vmem:[#allocation11 + $0x70] sm:$0xff]
        %v660 = vld [vmem:[#allocation11 + $0x78] sm:$0xff]
        %v661 = vld [vmem:[#allocation5 + $0x3] sm:$0x1]
        %v662 = vperm.slane %v661, 0
        %663 = vmatpush.msra.mxu0 %v660
        %664 = vmatpush.msra.mxu0 %v659
        %665 = vmatpush.msra.mxu0 %v658
        %666 = vmatpush.msra.mxu0 %v657
        %667 = vmatpush.msra.mxu0 %v656
        %668 = vmatpush.msra.mxu0 %v655
        %669 = vmatpush.msra.mxu0 %v654
        %670 = vmatpush.msra.mxu0 %v653
        %671 = vmatpush.msra.mxu0 %v652
        %672 = vmatpush.msra.mxu0 %v651
        %673 = vmatpush.msra.mxu0 %v650
        %674 = vmatpush.msra.mxu0 %v649
        %675 = vmatpush.msra.mxu0 %v648
        %676 = vmatpush.msra.mxu0 %v647
        %677 = vmatpush.msra.mxu0 %v646
        %678 = vmatpush.msra.mxu0 %v645
        %679 = vmatmul.f32.gmra.mxu0 %v643
        %v680 = vpop.f32.mrf.mxu0
        %v681 = vadd.f32 %v662, %v680
        %682 = vdwg.mxu0
        %683 = vst [vmem:[%s523 + $0x20] sm:$0xff] %v681
        %v684 = vld [vmem:[#allocation13] sm:$0xff]
        %v685 = vld [vmem:[#allocation13 + $0x8] sm:$0xff]
        %v686 = vld [vmem:[#allocation13 + $0x10] sm:$0xff]
        %v687 = vld [vmem:[#allocation13 + $0x18] sm:$0xff]
        %v688 = vld [vmem:[#allocation13 + $0x20] sm:$0xff]
        %v689 = vld [vmem:[#allocation13 + $0x28] sm:$0xff]
        %v690 = vld [vmem:[#allocation13 + $0x30] sm:$0xff]
        %v691 = vld [vmem:[#allocation13 + $0x38] sm:$0xff]
        %v692 = vld [vmem:[#allocation13 + $0x40] sm:$0xff]
        %v693 = vld [vmem:[#allocation13 + $0x48] sm:$0xff]
        %v694 = vld [vmem:[#allocation13 + $0x50] sm:$0xff]
        %v695 = vld [vmem:[#allocation13 + $0x58] sm:$0xff]
        %v696 = vld [vmem:[#allocation13 + $0x60] sm:$0xff]
        %v697 = vld [vmem:[#allocation13 + $0x68] sm:$0xff]
        %v698 = vld [vmem:[#allocation13 + $0x70] sm:$0xff]
        %v699 = vld [vmem:[#allocation13 + $0x78] sm:$0xff]
        %v700 = vld [vmem:[#allocation5 + $0x4] sm:$0x1]
        %v701 = vperm.slane %v700, 0
        %702 = vmatpush.msra.mxu0 %v699
        %703 = vmatpush.msra.mxu0 %v698
        %704 = vmatpush.msra.mxu0 %v697
        %705 = vmatpush.msra.mxu0 %v696
        %706 = vmatpush.msra.mxu0 %v695
        %707 = vmatpush.msra.mxu0 %v694
        %708 = vmatpush.msra.mxu0 %v693
        %709 = vmatpush.msra.mxu0 %v692
        %710 = vmatpush.msra.mxu0 %v691
        %711 = vmatpush.msra.mxu0 %v690
        %712 = vmatpush.msra.mxu0 %v689
        %713 = vmatpush.msra.mxu0 %v688
        %714 = vmatpush.msra.mxu0 %v687
        %715 = vmatpush.msra.mxu0 %v686
        %716 = vmatpush.msra.mxu0 %v685
        %717 = vmatpush.msra.mxu0 %v684
        %718 = vmatmul.f32.gmra.mxu0 %v681
        %v719 = vpop.f32.mrf.mxu0
        %v720 = vadd.f32 %v701, %v719
        %721 = vdwg.mxu0
        %v722 = vmax.f32 %v720, 0.0
        %v723 = vld [vmem:[#allocation14] sm:$0xff]
        %v724 = vld [vmem:[#allocation14 + $0x8] sm:$0xff]
        %v725 = vld [vmem:[#allocation14 + $0x10] sm:$0xff]
        %v726 = vld [vmem:[#allocation14 + $0x18] sm:$0xff]
        %v727 = vld [vmem:[#allocation14 + $0x20] sm:$0xff]
        %v728 = vld [vmem:[#allocation14 + $0x28] sm:$0xff]
        %v729 = vld [vmem:[#allocation14 + $0x30] sm:$0xff]
        %v730 = vld [vmem:[#allocation14 + $0x38] sm:$0xff]
        %v731 = vld [vmem:[#allocation14 + $0x40] sm:$0xff]
        %v732 = vld [vmem:[#allocation14 + $0x48] sm:$0xff]
        %v733 = vld [vmem:[#allocation14 + $0x50] sm:$0xff]
        %v734 = vld [vmem:[#allocation14 + $0x58] sm:$0xff]
        %v735 = vld [vmem:[#allocation14 + $0x60] sm:$0xff]
        %v736 = vld [vmem:[#allocation14 + $0x68] sm:$0xff]
        %v737 = vld [vmem:[#allocation14 + $0x70] sm:$0xff]
        %v738 = vld [vmem:[#allocation14 + $0x78] sm:$0xff]
        %v739 = vld [vmem:[#allocation5 + $0x5] sm:$0x1]
        %v740 = vperm.slane %v739, 0
        %741 = vmatpush.msra.mxu0 %v738
        %742 = vmatpush.msra.mxu0 %v737
        %743 = vmatpush.msra.mxu0 %v736
        %744 = vmatpush.msra.mxu0 %v735
        %745 = vmatpush.msra.mxu0 %v734
        %746 = vmatpush.msra.mxu0 %v733
        %747 = vmatpush.msra.mxu0 %v732
        %748 = vmatpush.msra.mxu0 %v731
        %749 = vmatpush.msra.mxu0 %v730
        %750 = vmatpush.msra.mxu0 %v729
        %751 = vmatpush.msra.mxu0 %v728
        %752 = vmatpush.msra.mxu0 %v727
        %753 = vmatpush.msra.mxu0 %v726
        %754 = vmatpush.msra.mxu0 %v725
        %755 = vmatpush.msra.mxu0 %v724
        %756 = vmatpush.msra.mxu0 %v723
        %757 = vmatmul.f32.gmra.mxu0 %v722
        %v758 = vpop.f32.mrf.mxu0
        %v759 = vadd.f32 %v740, %v758
        %760 = vdwg.mxu0
        %v761 = vmax.f32 %v759, 0.0
        %v762 = vld [vmem:[#allocation16] sm:$0xff]
        %v763 = vld [vmem:[#allocation16 + $0x8] sm:$0xff]
        %v764 = vld [vmem:[#allocation16 + $0x10] sm:$0xff]
        %v765 = vld [vmem:[#allocation16 + $0x18] sm:$0xff]
        %v766 = vld [vmem:[#allocation16 + $0x20] sm:$0xff]
        %v767 = vld [vmem:[#allocation16 + $0x28] sm:$0xff]
        %v768 = vld [vmem:[#allocation16 + $0x30] sm:$0xff]
        %v769 = vld [vmem:[#allocation16 + $0x38] sm:$0xff]
        %v770 = vld [vmem:[#allocation16 + $0x40] sm:$0xff]
        %v771 = vld [vmem:[#allocation16 + $0x48] sm:$0xff]
        %v772 = vld [vmem:[#allocation16 + $0x50] sm:$0xff]
        %v773 = vld [vmem:[#allocation16 + $0x58] sm:$0xff]
        %v774 = vld [vmem:[#allocation16 + $0x60] sm:$0xff]
        %v775 = vld [vmem:[#allocation16 + $0x68] sm:$0xff]
        %v776 = vld [vmem:[#allocation16 + $0x70] sm:$0xff]
        %v777 = vld [vmem:[#allocation16 + $0x78] sm:$0xff]
        %v778 = vld [vmem:[#allocation5 + $0x6] sm:$0x1]
        %v779 = vperm.slane %v778, 0
        %780 = vmatpush.msra.mxu0 %v777
        %781 = vmatpush.msra.mxu0 %v776
        %782 = vmatpush.msra.mxu0 %v775
        %783 = vmatpush.msra.mxu0 %v774
        %784 = vmatpush.msra.mxu0 %v773
        %785 = vmatpush.msra.mxu0 %v772
        %786 = vmatpush.msra.mxu0 %v771
        %787 = vmatpush.msra.mxu0 %v770
        %788 = vmatpush.msra.mxu0 %v769
        %789 = vmatpush.msra.mxu0 %v768
        %790 = vmatpush.msra.mxu0 %v767
        %791 = vmatpush.msra.mxu0 %v766
        %792 = vmatpush.msra.mxu0 %v765
        %793 = vmatpush.msra.mxu0 %v764
        %794 = vmatpush.msra.mxu0 %v763
        %795 = vmatpush.msra.mxu0 %v762
        %796 = vmatmul.f32.gmra.mxu0 %v761
        %v797 = vpop.f32.mrf.mxu0
        %v798 = vadd.f32 %v779, %v797
        %799 = vdwg.mxu0
        %v800 = vmax.f32 %v798, 0.0
        %v801 = vld [vmem:[#allocation17] sm:$0xff]
        %v802 = vld [vmem:[#allocation17 + $0x8] sm:$0xff]
        %v803 = vld [vmem:[#allocation17 + $0x10] sm:$0xff]
        %v804 = vld [vmem:[#allocation17 + $0x18] sm:$0xff]
        %v805 = vld [vmem:[#allocation17 + $0x20] sm:$0xff]
        %v806 = vld [vmem:[#allocation17 + $0x28] sm:$0xff]
        %v807 = vld [vmem:[#allocation17 + $0x30] sm:$0xff]
        %v808 = vld [vmem:[#allocation17 + $0x38] sm:$0xff]
        %v809 = vld [vmem:[#allocation17 + $0x40] sm:$0xff]
        %v810 = vld [vmem:[#allocation17 + $0x48] sm:$0xff]
        %v811 = vld [vmem:[#allocation17 + $0x50] sm:$0xff]
        %v812 = vld [vmem:[#allocation17 + $0x58] sm:$0xff]
        %v813 = vld [vmem:[#allocation17 + $0x60] sm:$0xff]
        %v814 = vld [vmem:[#allocation17 + $0x68] sm:$0xff]
        %v815 = vld [vmem:[#allocation17 + $0x70] sm:$0xff]
        %v816 = vld [vmem:[#allocation17 + $0x78] sm:$0xff]
        %v817 = vld [vmem:[#allocation5 + $0x7] sm:$0x1]
        %v818 = vperm.slane %v817, 0
        %819 = vmatpush.msra.mxu0 %v816
        %820 = vmatpush.msra.mxu0 %v815
        %821 = vmatpush.msra.mxu0 %v814
        %822 = vmatpush.msra.mxu0 %v813
        %823 = vmatpush.msra.mxu0 %v812
        %824 = vmatpush.msra.mxu0 %v811
        %825 = vmatpush.msra.mxu0 %v810
        %826 = vmatpush.msra.mxu0 %v809
        %827 = vmatpush.msra.mxu0 %v808
        %828 = vmatpush.msra.mxu0 %v807
        %829 = vmatpush.msra.mxu0 %v806
        %830 = vmatpush.msra.mxu0 %v805
        %831 = vmatpush.msra.mxu0 %v804
        %832 = vmatpush.msra.mxu0 %v803
        %833 = vmatpush.msra.mxu0 %v802
        %834 = vmatpush.msra.mxu0 %v801
        %835 = vmatmul.f32.gmra.mxu0 %v800
        %v836 = vpop.f32.mrf.mxu0
        %v837 = vadd.f32 %v818, %v836
        %838 = vdwg.mxu0
        %839 = vst [vmem:[%s523] sm:$0xff] %v837
        %s840 = sand.u32 %s255, 1
        %s841 = scalar_lea.sflag [#allocation4], %s840
        %s842 = sand.u32 %s255, 1
        %s843 = smul.addr %s842, 40
        %s844 = scalar_lea.vmem [#allocation19], %s843
        // Predicated region
        $region101: #{tpu_custom_call.1} parent=59 // pred_check
          %p845 = pneg %p265
        $region102: #{tpu_custom_call.1} parent=59 // pred_check_branch
          %847 = sbr.rel (%p845) target = $region104
        $region103: #{tpu_custom_call.1} parent=59 // pred_region
          %849 = vsyncadd %s841, 0
          %s850 = smul.addr %s32, 5
          %s851 = smul.addr %s850, 8
          %s852 = scalar_lea.hbm %s10, %s851
          %s854 = sshll.u32 %s844, 4
          %s855 = int_to_ptr.vmem [resolvable:$true] %s854
          %s856 = sshll.u32 %s852, 4
          %s857 = int_to_ptr.hbm [resolvable:$true] %s856
          %859 = dma.vmem_to_hbm [thread:$0]  %s855, 640, %s857, %s841
        $region104: #{tpu_custom_call.1} parent=59 // pred_fallthru
          _
      $region60: #{tpu_custom_call.1} parent=5 // pred_fallthru
        _
      %p860 = scmp.le.s32.totalorder 2, %s27
      // Predicated region
      $region105: #{tpu_custom_call.1} parent=5 // pred_check
        %p861 = pneg %p860
      $region106: #{tpu_custom_call.1} parent=5 // pred_check_branch
        %863 = sbr.rel (%p861) target = $region108
      $region107: #{tpu_custom_call.1} parent=5 // pred_region
        %s864 = ssub.s32 %s27, 2
        // Predicated region
        $region109: #{tpu_custom_call.1} parent=107 // pred_check
          %p865 = pneg %p271
        $region110: #{tpu_custom_call.1} parent=107 // pred_check_branch
          %867 = sbr.rel (%p865) target = $region112
        $region111: #{tpu_custom_call.1} parent=107 // pred_region
          %s868 = sand.u32 %s256, 1
          %s869 = scalar_lea.sflag [#allocation4], %s868
          %s870 = sand.u32 %s256, 1
          %s871 = smul.addr %s870, 40
          %s872 = scalar_lea.vmem [#allocation19], %s871
          %874 = dma.done %s869, 640
        $region112: #{tpu_custom_call.1} parent=107 // pred_fallthru
          _
      $region108: #{tpu_custom_call.1} parent=5 // pred_fallthru
        _
    $region6: #{tpu_custom_call.1} parent=1 // loop_footer
      %s31 = sadd.s32 1, %s27
    $region7: #{tpu_custom_call.1} parent=1 // loop_footer_branch
      %26 = sbr.rel target = $region3
    $region8: #{tpu_custom_call.1} parent=1 // loop_exit
      _
    %875 = vsyncpa [#allocation3], 1
    %s876 = scalar_lea.sflag [#allocation3], 1
    %877 = vsyncpa %s876, 1
    %878 = vsyncpa [#allocation6], 1
    %879 = vsyncpa [#allocation9], 1
    %880 = vsyncpa [#allocation12], 1
    %881 = vsyncpa [#allocation15], 1
    %882 = vsyncpa [#allocation18], 1
    %883 = vsyncpa [#allocation4], 1
    %s884 = scalar_lea.sflag [#allocation4], 1
    %885 = vsyncpa %s884, 1

</llo_original>
